<compile_context>
chip_gen: v5e
topology: v5e:2x2
jax: 0.10.0
libtpu: 0.0.40
codegen_flags: <defaults>
</compile_context>

<pallas_src>
import functools

import jax
import jax.numpy as jnp
from jax import lax
from jax.experimental import pallas as pl
from jax.experimental.pallas import tpu as pltpu


_INV_SQRT2 = 0.7071067811865476


def _round_up(x, m):
    return ((x + m - 1) // m) * m


def _gelu_exact(x):
    # PyTorch nn.GELU() default is the exact erf formulation (computed in f32).
    return 0.5 * x * (1.0 + lax.erf(x * _INV_SQRT2))


def boom_kernel(x_ref, w1t_ref, b1_ref, w2t_ref, b2_ref, o_ref, acc_ref, xb_ref):
    # Grid = (row tiles, H chunks).  For each row tile we sweep the H chunks,
    # accumulating the second matmul into an f32 scratch.
    #   x_ref:   (tm, D)   native-dtype row tile (cast once into xb_ref)
    #   w1t_ref: (D, th)   bf16 ff1 weight chunk (pre-transposed)
    #   b1_ref:  (1, th)   f32
    #   w2t_ref: (th, D)   bf16 ff2 weight chunk (pre-transposed)
    #   b2_ref:  (1, D)    f32
    #   o_ref:   (tm, D)
    #   acc_ref: (tm, D)   f32 scratch accumulator
    #   xb_ref:  (tm, D)   compute-dtype (bf16) copy of the row tile
    k = pl.program_id(1)

    @pl.when(k == 0)
    def _init():
        acc_ref[...] = jnp.zeros_like(acc_ref)
        xb_ref[...] = x_ref[...].astype(xb_ref.dtype)   # cast once per row tile

    # ff1 chunk: (tm, D) @ (D, th) -> (tm, th), f32 accumulation on the MXU.
    h = jnp.dot(xb_ref[...], w1t_ref[...], preferred_element_type=jnp.float32)
    h = _gelu_exact(h + b1_ref[...])
    # dropout p=0 -> identity (inference).

    # ff2 contribution of this H chunk, accumulated in f32.
    acc_ref[...] += jnp.dot(
        h.astype(w2t_ref.dtype), w2t_ref[...],
        preferred_element_type=jnp.float32,
    )

    @pl.when(k == pl.num_programs(1) - 1)
    def _finalize():
        o_ref[...] = (acc_ref[...] + b2_ref[...]).astype(o_ref.dtype)


def prepare_boom_params(w1, b1, w2, b2, compute_dtype=jnp.bfloat16):
    """One-time param prep (kept OUT of the per-call jit path).

    nn.Linear layout in:  w1 (H, D), b1 (H,), w2 (D, H), b2 (D,).
    Returns pre-transposed / pre-cast: w1t (D, H) bf16, b1 (1, H) f32,
                                       w2t (H, D) bf16, b2 (1, D) f32.
    """
    w1t = jnp.asarray(w1.T, dtype=compute_dtype)
    w2t = jnp.asarray(w2.T, dtype=compute_dtype)
    b1r = jnp.asarray(b1, dtype=jnp.float32).reshape(1, -1)
    b2r = jnp.asarray(b2, dtype=jnp.float32).reshape(1, -1)
    return w1t, b1r, w2t, b2r


def _vmem_capacity_bytes():
    try:
        return int(pltpu.get_tpu_info().vmem_capacity_bytes)
    except Exception:
        return 64 * 1024 * 1024   # conservative (v7x-class) fallback


def _largest_aligned_divisor(n, cap, align=128):
    """Largest multiple-of-`align` divisor of n that is <= cap; else n (full)."""
    cap = min(cap, n)
    d = (cap // align) * align
    while d >= align:
        if n % d == 0:
            return d
        d -= align
    return n


def _choose_tiles(N, D, H, in_itemsize, out_itemsize, compute_itemsize):
    vmem_cap = _vmem_capacity_bytes()
    vmem_limit = int(vmem_cap * 0.6)          # ~38 MiB on v7x, ~77 MiB on v5e/v6e
    budget = int(vmem_limit * 0.85)           # headroom for compiler temps

    def usage(tm, th):
        w = 2 * D * th * compute_itemsize * 2                      # weights, dbl-buffered
        act = tm * D * (2 * in_itemsize + 2 * out_itemsize + 4 + compute_itemsize)
        tmp = tm * th * (4 + compute_itemsize)                     # f32 h + bf16 copy
        bias = 2 * (th + D) * 4
        return w + act + tmp + bias

    # 1) Weight-resident path: th = H gives a constant weight block index, so
    #    Pallas fetches each weight exactly once for the whole kernel.
    tm_res = min(256, _round_up(N, 16))
    if usage(tm_res, H) <= budget:
        return tm_res, H, vmem_limit

    # 2) Streaming path: big row tile for arithmetic intensity, lane-aligned H chunk.
    small_vmem = vmem_cap <= 80 * 1024 * 1024                      # v7x-class (64 MiB / TC)
    tm = min(512 if small_vmem else 1024, _round_up(N, 16))
    th = _largest_aligned_divisor(H, 512 if small_vmem else 1024)
    while usage(tm, th) > budget and tm > 16:
        tm = max(16, ((tm // 2) // 16) * 16)
    while usage(tm, th) > budget and th > 128:
        new_th = _largest_aligned_divisor(H, max(128, th // 2))
        if new_th >= th:
            break
        th = new_th
    return tm, th, vmem_limit


@functools.partial(jax.jit, static_argnames=("tm", "th"))
def boom_forward(x, w1t, b1r, w2t, b2r, *, tm=None, th=None):
    """x: (..., D) any float dtype.  w1t: (D, H) bf16, b1r: (1, H) f32,
    w2t: (H, D) bf16, b2r: (1, D) f32."""
    orig_shape = x.shape
    out_dtype = x.dtype
    D = orig_shape[-1]
    H = w1t.shape[1]
    compute_dtype = w1t.dtype

    xf = x.reshape(-1, D)                # native dtype; cast happens in-kernel
    N = xf.shape[0]

    in_itemsize = jnp.dtype(x.dtype).itemsize
    out_itemsize = jnp.dtype(out_dtype).itemsize
    c_itemsize = jnp.dtype(compute_dtype).itemsize

    tm_auto, th_auto, vmem_limit = _choose_tiles(
        N, D, H, in_itemsize, out_itemsize, c_itemsize)
    tm_eff = tm_auto if tm is None else min(tm, _round_up(N, 16))
    th_eff = th_auto if th is None else th
    if H % th_eff != 0:
        th_eff = H

    n_pad = _round_up(N, tm_eff)
    if n_pad != N:
        xf = jnp.pad(xf, ((0, n_pad - N), (0, 0)))

    n_row_tiles = n_pad // tm_eff
    K = H // th_eff
    grid = (n_row_tiles, K)

    # Serpentine H-chunk order: last weight chunk of row tile i equals the first
    # chunk of row tile i+1, so Pallas skips one weight DMA per boundary.
    def _sk(i, k):
        return k + (i % 2) * (K - 1 - 2 * k)

    w1_map = lambda i, k: (0, _sk(i, k))
    b1_map = lambda i, k: (0, _sk(i, k))
    w2_map = lambda i, k: (_sk(i, k), 0)

    # Weights are fetched once if resident (K == 1), else once per row tile.
    weight_bytes = 2 * D * H * c_itemsize * (n_row_tiles if K > 1 else 1)
    cost = pl.CostEstimate(
        flops=4 * n_pad * D * H,
        transcendentals=n_pad * H,
        bytes_accessed=(n_pad * D * (in_itemsize + out_itemsize)
                        + weight_bytes + (H + D) * 4),
    )

    out = pl.pallas_call(
        boom_kernel,
        out_shape=jax.ShapeDtypeStruct((n_pad, D), out_dtype),
        grid_spec=pltpu.PrefetchScalarGridSpec(
            num_scalar_prefetch=0,
            grid=grid,
            in_specs=[
                pl.BlockSpec((tm_eff, D), lambda i, k: (i, 0)),    # x rows (native dtype)
                pl.BlockSpec((D, th_eff), w1_map),                 # W1^T chunk
                pl.BlockSpec((1, th_eff), b1_map),                 # b1 chunk
                pl.BlockSpec((th_eff, D), w2_map),                 # W2^T chunk
                pl.BlockSpec((1, D), lambda i, k: (0, 0)),         # b2
            ],
            out_specs=pl.BlockSpec((tm_eff, D), lambda i, k: (i, 0)),
            scratch_shapes=[
                pltpu.VMEM((tm_eff, D), jnp.float32),              # f32 accumulator
                pltpu.VMEM((tm_eff, D), compute_dtype),            # bf16 copy of x tile
            ],
        ),
        compiler_params=pltpu.CompilerParams(
            dimension_semantics=("parallel", "arbitrary"),
            vmem_limit_bytes=vmem_limit,
        ),
        cost_estimate=cost,
    )(xf, w1t, b1r, w2t, b2r)

    if n_pad != N:
        out = out[:N]
    return out.reshape(orig_shape)


def boom_reference(x, w1, b1, w2, b2, compute_dtype=jnp.bfloat16):
    # Same math as the kernel: bf16 operands, f32 accumulation, exact-erf GELU.
    cd = compute_dtype
    h = jnp.dot(x.astype(cd), w1.T.astype(cd), preferred_element_type=jnp.float32)
    h = _gelu_exact(h + b1.astype(jnp.float32))
    out = jnp.dot(h.astype(cd), w2.T.astype(cd), preferred_element_type=jnp.float32)
    return (out + b2.astype(jnp.float32)).astype(x.dtype)


def boom_reference_f32(x, w1, b1, w2, b2):
    h = x @ w1.T + b1
    h = _gelu_exact(h)
    return h @ w2.T + b2


if __name__ == "__main__":
    # Small shapes consistent with the module: hidden_dim % input_dim == 0.
    batch, seq, input_dim, hidden_dim = 2, 8, 32, 128

    key = jax.random.PRNGKey(0)
    kx, k1, kb1, k2, kb2 = jax.random.split(key, 5)

    x = jax.random.normal(kx, (batch, seq, input_dim), dtype=jnp.float32)
    # nn.Linear-shaped params: weight (out, in), bias (out,)
    w1 = jax.random.normal(k1, (hidden_dim, input_dim), dtype=jnp.float32) * 0.05
    b1 = jax.random.normal(kb1, (hidden_dim,), dtype=jnp.float32) * 0.05
    w2 = jax.random.normal(k2, (input_dim, hidden_dim), dtype=jnp.float32) * 0.05
    b2 = jax.random.normal(kb2, (input_dim,), dtype=jnp.float32) * 0.05

    params = prepare_boom_params(w1, b1, w2, b2)
    out = boom_forward(x, *params)
    out = jax.block_until_ready(out)

    assert out.shape == x.shape

    ref_bf16 = boom_reference(x, w1, b1, w2, b2)
    assert jnp.allclose(out, ref_bf16, atol=1e-2, rtol=1e-2), "mismatch vs bf16 reference"

    ref_f32 = boom_reference_f32(x, w1, b1, w2, b2)
    assert jnp.allclose(out, ref_f32, atol=5e-2, rtol=5e-2), "mismatch vs f32 reference"

    # TODO(synk): `shortcut=True` branch (split + stack + sum of the GELU
    # output, no ff2) is not implemented; module default is shortcut=False.
    print("KERNEL_OK")
</pallas_src>

<mosaic_0001>
module attributes {stable_mosaic.version = 11 : i64} {
  func.func @boom_kernel(%arg0: i32, %arg1: i32, %arg2: memref<16x32xf32, #tpu.memory_space<vmem>>, %arg3: memref<32x128xbf16, #tpu.memory_space<vmem>>, %arg4: memref<1x128xf32, #tpu.memory_space<vmem>>, %arg5: memref<128x32xbf16, #tpu.memory_space<vmem>>, %arg6: memref<1x32xf32, #tpu.memory_space<vmem>>, %arg7: memref<16x32xf32, #tpu.memory_space<vmem>>, %arg8: memref<16x32xf32, #tpu.memory_space<vmem>>, %arg9: memref<16x32xbf16, #tpu.memory_space<vmem>>) attributes {dimension_semantics = [#tpu.dimension_semantics<parallel>, #tpu.dimension_semantics<arbitrary>], iteration_bounds = array<i64: 1, 1>, scalar_prefetch = 0 : i64, scratch_operands = 2 : i64, tpu.core_type = #tpu.core_type<tc>, window_params = [{transform_indices = @transform_0, window_bounds = array<i64: 16, 32>}, {transform_indices = @transform_1, window_bounds = array<i64: 32, 128>}, {transform_indices = @transform_2, window_bounds = array<i64: 1, 128>}, {transform_indices = @transform_3, window_bounds = array<i64: 128, 32>}, {pipeline_mode = #tpu.pipeline_mode<synchronous>, transform_indices = @transform_4, window_bounds = array<i64: 1, 32>}, {transform_indices = @transform_5, window_bounds = array<i64: 16, 32>}]} {
    %c0_i32 = arith.constant 0 : i32
    %0 = arith.cmpi eq, %arg1, %c0_i32 : i32
    %1 = arith.extui %0 : i1 to i32
    %c0_i32_0 = arith.constant 0 : i32
    %2 = arith.cmpi ne, %1, %c0_i32_0 : i32
    scf.if %2 {
      %cst_18 = arith.constant 0.000000e+00 : f32
      %26 = vector.broadcast %cst_18 : f32 to vector<16x32xf32>
      %c0_19 = arith.constant 0 : index
      %c0_20 = arith.constant 0 : index
      %27 = vector.load %arg8[%c0_19, %c0_20] : memref<16x32xf32, #tpu.memory_space<vmem>>, vector<16x32xf32>
      tpu.vector_store %arg8[%c0_19, %c0_20], %26 {strides = array<i32>} : memref<16x32xf32, #tpu.memory_space<vmem>>, vector<16x32xf32>,
      %c0_21 = arith.constant 0 : index
      %c0_22 = arith.constant 0 : index
      %28 = vector.load %arg2[%c0_21, %c0_22] : memref<16x32xf32, #tpu.memory_space<vmem>>, vector<16x32xf32>
      %29 = arith.truncf %28 : vector<16x32xf32> to vector<16x32xbf16>
      %c0_23 = arith.constant 0 : index
      %c0_24 = arith.constant 0 : index
      %30 = vector.load %arg9[%c0_23, %c0_24] : memref<16x32xbf16, #tpu.memory_space<vmem>>, vector<16x32xbf16>
      tpu.vector_store %arg9[%c0_23, %c0_24], %29 {strides = array<i32>} : memref<16x32xbf16, #tpu.memory_space<vmem>>, vector<16x32xbf16>,
    } else {
    }
    %c0 = arith.constant 0 : index
    %c0_1 = arith.constant 0 : index
    %3 = vector.load %arg9[%c0, %c0_1] : memref<16x32xbf16, #tpu.memory_space<vmem>>, vector<16x32xbf16>
    %c0_2 = arith.constant 0 : index
    %c0_3 = arith.constant 0 : index
    %4 = vector.load %arg3[%c0_2, %c0_3] : memref<32x128xbf16, #tpu.memory_space<vmem>>, vector<32x128xbf16>
    %cst = arith.constant dense<0.000000e+00> : vector<16x128xf32>
    %5 = tpu.matmul %3, %4, %cst {dimension_numbers = #tpu.dot_dimension_numbers<[1], [0], [0], [1], [0, 0, 1, 1], [], []>} : vector<16x32xbf16>, vector<32x128xbf16>, vector<16x128xf32> -> vector<16x128xf32>
    %c0_4 = arith.constant 0 : index
    %c0_5 = arith.constant 0 : index
    %6 = vector.load %arg4[%c0_4, %c0_5] : memref<1x128xf32, #tpu.memory_space<vmem>>, vector<1x128xf32>
    %7 = vector.broadcast %6 : vector<1x128xf32> to vector<16x128xf32>
    %8 = arith.addf %5, %7 : vector<16x128xf32>
    %cst_6 = arith.constant 5.000000e-01 : f32
    %9 = vector.broadcast %cst_6 : f32 to vector<16x128xf32>
    %10 = arith.mulf %9, %8 : vector<16x128xf32>
    %cst_7 = arith.constant 0.707106769 : f32
    %11 = vector.broadcast %cst_7 : f32 to vector<16x128xf32>
    %12 = arith.mulf %8, %11 : vector<16x128xf32>
    %13 = math.erf %12 : vector<16x128xf32>
    %cst_8 = arith.constant 1.000000e+00 : f32
    %14 = vector.broadcast %cst_8 : f32 to vector<16x128xf32>
    %15 = arith.addf %14, %13 : vector<16x128xf32>
    %16 = arith.mulf %10, %15 : vector<16x128xf32>
    %c0_9 = arith.constant 0 : index
    %c0_10 = arith.constant 0 : index
    %17 = vector.load %arg8[%c0_9, %c0_10] : memref<16x32xf32, #tpu.memory_space<vmem>>, vector<16x32xf32>
    %18 = arith.truncf %16 : vector<16x128xf32> to vector<16x128xbf16>
    %c0_11 = arith.constant 0 : index
    %c0_12 = arith.constant 0 : index
    %19 = vector.load %arg5[%c0_11, %c0_12] : memref<128x32xbf16, #tpu.memory_space<vmem>>, vector<128x32xbf16>
    %cst_13 = arith.constant dense<0.000000e+00> : vector<16x32xf32>
    %20 = tpu.matmul %18, %19, %cst_13 {dimension_numbers = #tpu.dot_dimension_numbers<[1], [0], [0], [1], [0, 0, 1, 1], [], []>} : vector<16x128xbf16>, vector<128x32xbf16>, vector<16x32xf32> -> vector<16x32xf32>
    %21 = arith.addf %17, %20 : vector<16x32xf32>
    %c0_14 = arith.constant 0 : index
    %c0_15 = arith.constant 0 : index
    %22 = vector.load %arg8[%c0_14, %c0_15] : memref<16x32xf32, #tpu.memory_space<vmem>>, vector<16x32xf32>
    tpu.vector_store %arg8[%c0_14, %c0_15], %21 {strides = array<i32>} : memref<16x32xf32, #tpu.memory_space<vmem>>, vector<16x32xf32>,
    %c0_i32_16 = arith.constant 0 : i32
    %23 = arith.cmpi eq, %arg1, %c0_i32_16 : i32
    %24 = arith.extui %23 : i1 to i32
    %c0_i32_17 = arith.constant 0 : i32
    %25 = arith.cmpi ne, %24, %c0_i32_17 : i32
    scf.if %25 {
      %c0_18 = arith.constant 0 : index
      %c0_19 = arith.constant 0 : index
      %26 = vector.load %arg8[%c0_18, %c0_19] : memref<16x32xf32, #tpu.memory_space<vmem>>, vector<16x32xf32>
      %c0_20 = arith.constant 0 : index
      %c0_21 = arith.constant 0 : index
      %27 = vector.load %arg6[%c0_20, %c0_21] : memref<1x32xf32, #tpu.memory_space<vmem>>, vector<1x32xf32>
      %28 = vector.broadcast %27 : vector<1x32xf32> to vector<16x32xf32>
      %29 = arith.addf %26, %28 : vector<16x32xf32>
      %c0_22 = arith.constant 0 : index
      %c0_23 = arith.constant 0 : index
      %30 = vector.load %arg7[%c0_22, %c0_23] : memref<16x32xf32, #tpu.memory_space<vmem>>, vector<16x32xf32>
      tpu.vector_store %arg7[%c0_22, %c0_23], %29 {strides = array<i32>} : memref<16x32xf32, #tpu.memory_space<vmem>>, vector<16x32xf32>,
    } else {
    }
    return
  }
  func.func @transform_0(%arg0: i32, %arg1: i32) -> (i32, i32) {
    %c0_i32 = arith.constant 0 : i32
    %c0_i32_0 = arith.constant 0 : i32
    return %arg0, %c0_i32 : i32, i32
  }
  func.func @transform_1(%arg0: i32, %arg1: i32) -> (i32, i32) {
    %c2_i32 = arith.constant 2 : i32
    %c0_i32 = arith.constant 0 : i32
    %0 = arith.cmpi eq, %c2_i32, %c0_i32 : i32
    %c1_i32 = arith.constant 1 : i32
    %1 = arith.select %0, %c1_i32, %c2_i32 : i32
    %2 = arith.remsi %arg0, %1 : i32
    %c0_i32_0 = arith.constant 0 : i32
    %3 = arith.cmpi ne, %2, %c0_i32_0 : i32
    %c0_i32_1 = arith.constant 0 : i32
    %4 = arith.cmpi slt, %2, %c0_i32_1 : i32
    %c0_i32_2 = arith.constant 0 : i32
    %5 = arith.cmpi slt, %1, %c0_i32_2 : i32
    %6 = arith.xori %4, %5 : i1
    %7 = arith.andi %6, %3 : i1
    %8 = arith.addi %2, %1 : i32
    %9 = arith.select %7, %8, %2 : i32
    %c2_i32_3 = arith.constant 2 : i32
    %10 = arith.muli %c2_i32_3, %arg1 : i32
    %c0_i32_4 = arith.constant 0 : i32
    %11 = arith.subi %c0_i32_4, %10 : i32
    %12 = arith.muli %9, %11 : i32
    %13 = arith.addi %arg1, %12 : i32
    %c0_i32_5 = arith.constant 0 : i32
    %c0_i32_6 = arith.constant 0 : i32
    return %c0_i32_5, %13 : i32, i32
  }
  func.func @transform_2(%arg0: i32, %arg1: i32) -> (i32, i32) {
    %c2_i32 = arith.constant 2 : i32
    %c0_i32 = arith.constant 0 : i32
    %0 = arith.cmpi eq, %c2_i32, %c0_i32 : i32
    %c1_i32 = arith.constant 1 : i32
    %1 = arith.select %0, %c1_i32, %c2_i32 : i32
    %2 = arith.remsi %arg0, %1 : i32
    %c0_i32_0 = arith.constant 0 : i32
    %3 = arith.cmpi ne, %2, %c0_i32_0 : i32
    %c0_i32_1 = arith.constant 0 : i32
    %4 = arith.cmpi slt, %2, %c0_i32_1 : i32
    %c0_i32_2 = arith.constant 0 : i32
    %5 = arith.cmpi slt, %1, %c0_i32_2 : i32
    %6 = arith.xori %4, %5 : i1
    %7 = arith.andi %6, %3 : i1
    %8 = arith.addi %2, %1 : i32
    %9 = arith.select %7, %8, %2 : i32
    %c2_i32_3 = arith.constant 2 : i32
    %10 = arith.muli %c2_i32_3, %arg1 : i32
    %c0_i32_4 = arith.constant 0 : i32
    %11 = arith.subi %c0_i32_4, %10 : i32
    %12 = arith.muli %9, %11 : i32
    %13 = arith.addi %arg1, %12 : i32
    %c0_i32_5 = arith.constant 0 : i32
    %c0_i32_6 = arith.constant 0 : i32
    return %c0_i32_5, %13 : i32, i32
  }
  func.func @transform_3(%arg0: i32, %arg1: i32) -> (i32, i32) {
    %c2_i32 = arith.constant 2 : i32
    %c0_i32 = arith.constant 0 : i32
    %0 = arith.cmpi eq, %c2_i32, %c0_i32 : i32
    %c1_i32 = arith.constant 1 : i32
    %1 = arith.select %0, %c1_i32, %c2_i32 : i32
    %2 = arith.remsi %arg0, %1 : i32
    %c0_i32_0 = arith.constant 0 : i32
    %3 = arith.cmpi ne, %2, %c0_i32_0 : i32
    %c0_i32_1 = arith.constant 0 : i32
    %4 = arith.cmpi slt, %2, %c0_i32_1 : i32
    %c0_i32_2 = arith.constant 0 : i32
    %5 = arith.cmpi slt, %1, %c0_i32_2 : i32
    %6 = arith.xori %4, %5 : i1
    %7 = arith.andi %6, %3 : i1
    %8 = arith.addi %2, %1 : i32
    %9 = arith.select %7, %8, %2 : i32
    %c2_i32_3 = arith.constant 2 : i32
    %10 = arith.muli %c2_i32_3, %arg1 : i32
    %c0_i32_4 = arith.constant 0 : i32
    %11 = arith.subi %c0_i32_4, %10 : i32
    %12 = arith.muli %9, %11 : i32
    %13 = arith.addi %arg1, %12 : i32
    %c0_i32_5 = arith.constant 0 : i32
    %c0_i32_6 = arith.constant 0 : i32
    return %13, %c0_i32_5 : i32, i32
  }
  func.func @transform_4(%arg0: i32, %arg1: i32) -> (i32, i32) {
    %c0_i32 = arith.constant 0 : i32
    %c0_i32_0 = arith.constant 0 : i32
    %c0_i32_1 = arith.constant 0 : i32
    return %c0_i32, %c0_i32_0 : i32, i32
  }
  func.func @transform_5(%arg0: i32, %arg1: i32) -> (i32, i32) {
    %c0_i32 = arith.constant 0 : i32
    %c0_i32_0 = arith.constant 0 : i32
    return %arg0, %c0_i32 : i32, i32
  }
}

</mosaic_0001>

<llo_original>
// kernel: boom_forward.1
$region0: #{boom_forward.1}
  #allocation0 [shape = 'u32[]', space=smem, size = 0x4, offset = 0x4, fixed_abs, tag = 'smem constant byte address 0x4 - core index']
  #allocation1 [shape = 'u32[72,128]{1,0:T(1,128)}', space=vmem, size = 0x9000, scoped, tag = 'internal scratch']
  #allocation2 [shape = 'f32[16,32]{1,0:T(8,128)}', space=vmem, size = 0x2000, scoped, tag = 'scratch operand']
  #allocation3 [shape = 'bf16[16,32]{1,0:T(8,128)(2,1)}', space=vmem, size = 0x1000, scoped, tag = 'scratch operand']
  %s0 = inlined_call_operand.vmem [shape: f32[16,32], index: 0, kind: input, shape index: {}]
  %s1 = inlined_call_operand.vmem [shape: bf16[32,128], index: 1, kind: input, shape index: {}]
  %s2 = inlined_call_operand.vmem [shape: f32[1,128], index: 2, kind: input, shape index: {}]
  %s3 = inlined_call_operand.vmem [shape: bf16[128,32], index: 3, kind: input, shape index: {}]
  %s4 = inlined_call_operand.vmem [shape: f32[1,32], index: 4, kind: input, shape index: {}]
  %s5 = inlined_call_operand.hbm [shape: f32[16,32], index: 5, kind: output, shape index: {}]
  %s6 = sld [smem:[#allocation0]]
  $region38: #{boom_forward.1} parent=0
    _
  %s8 = ssub.s32 1, %s6
  %s9 = scalar_select 0, %s8, %s6
  $region1: #{boom_forward.1} parent=0
    #allocation4 [shape = 'u8[8192]{0}', space=vmem, size = 0x2000, scoped, tag = 'output window, operand 0, single buffered']
    #allocation5 [shape = 's32[1]{0}', space=sflag, size = 0x4, scoped, tag = 'scoped memory for boom_forward.1']
    %10 = vsyncpa [#allocation5], 0
    // Predicated region
    $region2: #{boom_forward.1} parent=1 // pred_check
      _
    $region3: #{boom_forward.1} parent=1 // pred_check_branch
      %12 = sbr.rel (0) target = $region5
    $region4: #{boom_forward.1} parent=1 // pred_region
      _
    $region5: #{boom_forward.1} parent=1 // pred_fallthru
      _
    // Predicated region
    $region6: #{boom_forward.1} parent=1 // pred_check
      _
    $region7: #{boom_forward.1} parent=1 // pred_check_branch
      %14 = sbr.rel (0) target = $region9
    $region8: #{boom_forward.1} parent=1 // pred_region
      %s15 = ssub.s32 0, 0
      %s16 = ssub.s32 0, 0
      %p17 = scmp.ne.s32.totalorder 0, 0
      %p18 = scmp.lt.s32.totalorder 0, 0
      %p19 = pnand %p18, %p17
      %p20 = pneg %p19
      %s21 = sadd.s32 0, 2
      %s22 = scalar_select %p20, %s21, 0
      %s23 = smul.u32 0, 2
      %s24 = ssub.s32 0, %s23
      %s25 = smul.u32 %s22, %s24
      %s26 = sadd.s32 0, %s25
      %p27 = scmp.lt.s32.totalorder %s26, 0
      %s28 = scalar_select %p27, %s26, 0
      %s29 = smul.addr %s28, 4
      %s30 = scalar_lea.vmem %s1, %s29
      %s31 = ssub.s32 0, 0
      %s32 = ssub.s32 0, 0
      %p33 = scmp.ne.s32.totalorder 0, 0
      %p34 = scmp.lt.s32.totalorder 0, 0
      %p35 = pnand %p34, %p33
      %p36 = pneg %p35
      %s37 = sadd.s32 0, 2
      %s38 = scalar_select %p36, %s37, 0
      %s39 = smul.u32 0, 2
      %s40 = ssub.s32 0, %s39
      %s41 = smul.u32 %s38, %s40
      %s42 = sadd.s32 0, %s41
    $region9: #{boom_forward.1} parent=1 // pred_fallthru
      _
    // Predicated region
    $region10: #{boom_forward.1} parent=1 // pred_check
      _
    $region11: #{boom_forward.1} parent=1 // pred_check_branch
      %44 = sbr.rel (0) target = $region13
    $region12: #{boom_forward.1} parent=1 // pred_region
      %s45 = ssub.s32 0, 0
      %s46 = ssub.s32 0, 0
      %p47 = scmp.ne.s32.totalorder 0, 0
      %p48 = scmp.lt.s32.totalorder 0, 0
      %p49 = pnand %p48, %p47
      %p50 = pneg %p49
      %s51 = sadd.s32 0, 2
      %s52 = scalar_select %p50, %s51, 0
      %s53 = smul.u32 0, 2
      %s54 = ssub.s32 0, %s53
      %s55 = smul.u32 %s52, %s54
      %s56 = sadd.s32 0, %s55
      %p57 = scmp.lt.s32.totalorder %s56, 0
      %s58 = scalar_select %p57, %s56, 0
      %s59 = scalar_lea.vmem %s2, %s58
      %s60 = ssub.s32 0, 0
      %s61 = ssub.s32 0, 0
      %p62 = scmp.ne.s32.totalorder 0, 0
      %p63 = scmp.lt.s32.totalorder 0, 0
      %p64 = pnand %p63, %p62
      %p65 = pneg %p64
      %s66 = sadd.s32 0, 2
      %s67 = scalar_select %p65, %s66, 0
      %s68 = smul.u32 0, 2
      %s69 = ssub.s32 0, %s68
      %s70 = smul.u32 %s67, %s69
      %s71 = sadd.s32 0, %s70
    $region13: #{boom_forward.1} parent=1 // pred_fallthru
      _
    // Predicated region
    $region14: #{boom_forward.1} parent=1 // pred_check
      _
    $region15: #{boom_forward.1} parent=1 // pred_check_branch
      %73 = sbr.rel (0) target = $region17
    $region16: #{boom_forward.1} parent=1 // pred_region
      %s74 = ssub.s32 0, 0
      %s75 = ssub.s32 0, 0
      %p76 = scmp.ne.s32.totalorder 0, 0
      %p77 = scmp.lt.s32.totalorder 0, 0
      %p78 = pnand %p77, %p76
      %p79 = pneg %p78
      %s80 = sadd.s32 0, 2
      %s81 = scalar_select %p79, %s80, 0
      %s82 = smul.u32 0, 2
      %s83 = ssub.s32 0, %s82
      %s84 = smul.u32 %s81, %s83
      %s85 = sadd.s32 0, %s84
      %s86 = smul.u32 16, %s85
      %p87 = scmp.lt.s32.totalorder %s86, 15
      %s88 = scalar_select %p87, %s86, 15
      %s89 = smul.addr %s88, 4
      %s90 = scalar_lea.vmem %s3, %s89
      %s91 = ssub.s32 0, 0
      %s92 = ssub.s32 0, 0
      %p93 = scmp.ne.s32.totalorder 0, 0
      %p94 = scmp.lt.s32.totalorder 0, 0
      %p95 = pnand %p94, %p93
      %p96 = pneg %p95
      %s97 = sadd.s32 0, 2
      %s98 = scalar_select %p96, %s97, 0
      %s99 = smul.u32 0, 2
      %s100 = ssub.s32 0, %s99
      %s101 = smul.u32 %s98, %s100
      %s102 = sadd.s32 0, %s101
      %s103 = smul.u32 16, %s102
    $region17: #{boom_forward.1} parent=1 // pred_fallthru
      _
    // Predicated region
    $region18: #{boom_forward.1} parent=1 // pred_check
      _
    $region19: #{boom_forward.1} parent=1 // pred_check_branch
      %105 = sbr.rel (0) target = $region21
    $region20: #{boom_forward.1} parent=1 // pred_region
      _
    $region21: #{boom_forward.1} parent=1 // pred_fallthru
      _
    %s106 = ssub.s32 0, 0
    %s107 = ssub.s32 0, 0
    %p108 = scmp.ne.s32.totalorder 0, 0
    %p109 = scmp.lt.s32.totalorder 0, 0
    %p110 = pnand %p109, %p108
    %p111 = pneg %p110
    %s112 = sadd.s32 0, 2
    %s113 = scalar_select %p111, %s112, 0
    %s114 = smul.u32 0, 2
    %s115 = ssub.s32 0, %s114
    %s116 = smul.u32 %s113, %s115
    %s117 = sadd.s32 0, %s116
    %p118 = scmp.lt.s32.totalorder %s117, 0
    %s119 = scalar_select %p118, %s117, 0
    %s120 = smul.addr %s119, 4
    %s121 = scalar_lea.vmem %s1, %s120
    %s122 = ssub.s32 0, 0
    %s123 = ssub.s32 0, 0
    %p124 = scmp.ne.s32.totalorder 0, 0
    %p125 = scmp.lt.s32.totalorder 0, 0
    %p126 = pnand %p125, %p124
    %p127 = pneg %p126
    %s128 = sadd.s32 0, 2
    %s129 = scalar_select %p127, %s128, 0
    %s130 = smul.u32 0, 2
    %s131 = ssub.s32 0, %s130
    %s132 = smul.u32 %s129, %s131
    %s133 = sadd.s32 0, %s132
    %p134 = scmp.lt.s32.totalorder %s133, 0
    %s135 = scalar_select %p134, %s133, 0
    %s136 = scalar_lea.vmem %s2, %s135
    %s137 = ssub.s32 0, 0
    %s138 = ssub.s32 0, 0
    %p139 = scmp.ne.s32.totalorder 0, 0
    %p140 = scmp.lt.s32.totalorder 0, 0
    %p141 = pnand %p140, %p139
    %p142 = pneg %p141
    %s143 = sadd.s32 0, 2
    %s144 = scalar_select %p142, %s143, 0
    %s145 = smul.u32 0, 2
    %s146 = ssub.s32 0, %s145
    %s147 = smul.u32 %s144, %s146
    %s148 = sadd.s32 0, %s147
    %s149 = smul.u32 16, %s148
    %p150 = scmp.lt.s32.totalorder %s149, 15
    %s151 = scalar_select %p150, %s149, 15
    %s152 = smul.addr %s151, 4
    %s153 = scalar_lea.vmem %s3, %s152
    %s154 = ssub.s32 0, 0
    %s155 = ssub.s32 0, 0
    %p156 = scmp.ne.s32.totalorder 0, 0
    %p157 = scmp.lt.s32.totalorder 0, 0
    %p158 = pnand %p157, %p156
    %p159 = pneg %p158
    %s160 = sadd.s32 0, 2
    %s161 = scalar_select %p159, %s160, 0
    %s162 = smul.u32 0, 2
    %s163 = ssub.s32 0, %s162
    %s164 = smul.u32 %s161, %s163
    %s165 = sadd.s32 0, %s164
    %p166 = scmp.lt.s32.totalorder %s165, 0
    %s167 = scalar_select %p166, %s165, 0
    %s168 = smul.addr %s167, 4
    %s169 = scalar_lea.vmem %s1, %s168
    %s170 = ssub.s32 0, 0
    %s171 = ssub.s32 0, 0
    %p172 = scmp.ne.s32.totalorder 0, 0
    %p173 = scmp.lt.s32.totalorder 0, 0
    %p174 = pnand %p173, %p172
    %p175 = pneg %p174
    %s176 = sadd.s32 0, 2
    %s177 = scalar_select %p175, %s176, 0
    %s178 = smul.u32 0, 2
    %s179 = ssub.s32 0, %s178
    %s180 = smul.u32 %s177, %s179
    %s181 = sadd.s32 0, %s180
    %s182 = ssub.s32 0, 0
    %s183 = ssub.s32 0, 0
    %p184 = scmp.ne.s32.totalorder 0, 0
    %p185 = scmp.lt.s32.totalorder 0, 0
    %p186 = pnand %p185, %p184
    %p187 = pneg %p186
    %s188 = sadd.s32 0, 2
    %s189 = scalar_select %p187, %s188, 0
    %s190 = smul.u32 0, 2
    %s191 = ssub.s32 0, %s190
    %s192 = smul.u32 %s189, %s191
    %s193 = sadd.s32 0, %s192
    %p194 = scmp.lt.s32.totalorder %s193, 0
    %s195 = scalar_select %p194, %s193, 0
    %s196 = scalar_lea.vmem %s2, %s195
    %s197 = ssub.s32 0, 0
    %s198 = ssub.s32 0, 0
    %p199 = scmp.ne.s32.totalorder 0, 0
    %p200 = scmp.lt.s32.totalorder 0, 0
    %p201 = pnand %p200, %p199
    %p202 = pneg %p201
    %s203 = sadd.s32 0, 2
    %s204 = scalar_select %p202, %s203, 0
    %s205 = smul.u32 0, 2
    %s206 = ssub.s32 0, %s205
    %s207 = smul.u32 %s204, %s206
    %s208 = sadd.s32 0, %s207
    %s209 = ssub.s32 0, 0
    %s210 = ssub.s32 0, 0
    %p211 = scmp.ne.s32.totalorder 0, 0
    %p212 = scmp.lt.s32.totalorder 0, 0
    %p213 = pnand %p212, %p211
    %p214 = pneg %p213
    %s215 = sadd.s32 0, 2
    %s216 = scalar_select %p214, %s215, 0
    %s217 = smul.u32 0, 2
    %s218 = ssub.s32 0, %s217
    %s219 = smul.u32 %s216, %s218
    %s220 = sadd.s32 0, %s219
    %s221 = smul.u32 16, %s220
    %p222 = scmp.lt.s32.totalorder %s221, 15
    %s223 = scalar_select %p222, %s221, 15
    %s224 = smul.addr %s223, 4
    %s225 = scalar_lea.vmem %s3, %s224
    %s226 = ssub.s32 0, 0
    %s227 = ssub.s32 0, 0
    %p228 = scmp.ne.s32.totalorder 0, 0
    %p229 = scmp.lt.s32.totalorder 0, 0
    %p230 = pnand %p229, %p228
    %p231 = pneg %p230
    %s232 = sadd.s32 0, 2
    %s233 = scalar_select %p231, %s232, 0
    %s234 = smul.u32 0, 2
    %s235 = ssub.s32 0, %s234
    %s236 = smul.u32 %s233, %s235
    %s237 = sadd.s32 0, %s236
    %s238 = smul.u32 16, %s237
    %p240 = scmp.eq.s32.totalorder 0, 0
    // Predicated region
    $region22: #{boom_forward.1} parent=1 // pred_check
      %p241 = pneg %p240
    $region23: #{boom_forward.1} parent=1 // pred_check_branch
      %243 = sbr.rel (%p241) target = $region25
    $region24: #{boom_forward.1} parent=1 // pred_region
      %vm244 = vcmask 261120
      %245 = vst.msk [vmem:[#allocation2] sm:$0xff] %vm244, 0.0
      %246 = vst.msk [vmem:[#allocation2 + $0x8] sm:$0xff] %vm244, 0.0
      %v247 = vld [vmem:[%s0] sm:$0xff]
      %v248 = vld [vmem:[%s0 + $0x8] sm:$0xff]
      %v249 = vpack.c.bf16 %v247, %v247
      %v250 = vpack.c.bf16 %v248, %v248
      %vm251 = vcmask 257024
      %252 = vst.msk [vmem:[#allocation3] sm:$0xf] %vm251, %v249
      %253 = vst.msk [vmem:[#allocation3 + $0x4] sm:$0xf] %vm251, %v250
    $region25: #{boom_forward.1} parent=1 // pred_fallthru
      _
    %v254 = vld [vmem:[#allocation3] sm:$0xf]
    %v255 = vld [vmem:[#allocation3 + $0x4] sm:$0xf]
    %v256 = vld [vmem:[%s169] sm:$0xf]
    %v257 = vld [vmem:[%s169 + $0x4] sm:$0xf]
    %v258 = vld [vmem:[%s169 + $0x8] sm:$0xf]
    %v259 = vld [vmem:[%s169 + $0xc] sm:$0xf]
    %v260 = vld [vmem:[%s196] sm:$0x1]
    %v262 = vperm.slane %v260, 0
    %v266 = vunpack.c.l.b16 %v254
    %v267 = vunpack.c.l.b16 %v255
    %v268 = vpack.c.b16 %v267, %v266
    %v273 = vunpack.c.l.b16 %v256
    %v274 = vunpack.c.l.b16 %v257
    %v275 = vunpack.c.l.b16 %v258
    %v276 = vunpack.c.l.b16 %v259
    %v277 = vpack.c.b16 %v274, %v273
    %v278 = vpack.c.b16 %v276, %v275
    %vm281 = vcmask 261120
    %v283 = vsel %vm281, %v268, 0
    %285 = vmatpush.bf16.msra.mxu0 0
    %286 = vmatpush.bf16.msra.mxu0 0
    %287 = vmatpush.bf16.msra.mxu0 0
    %288 = vmatpush.bf16.msra.mxu0 0
    %289 = vmatpush.bf16.msra.mxu0 0
    %290 = vmatpush.bf16.msra.mxu0 0
    %291 = vmatpush.bf16.msra.mxu0 %v278
    %292 = vmatpush.bf16.msra.mxu0 %v277
    %293 = vmatmul.bf16.gmra.mxu0 %v283
    %v294 = vpop.f32.mrf.mxu0
    %v295 = vadd.f32 %v262, %v294
    %v296 = vpop.f32.mrf.mxu0
    %v297 = vadd.f32 %v262, %v296
    %298 = vdwg.mxu0
    %v299 = vmul.f32 %v295, 0.5
    %v300 = vmul.f32 %v297, 0.5
    %v301 = vmul.f32 %v295, 0.70710677
    %v302 = vmul.f32 %v297, 0.70710677
    %v303 = vmul.f32 %v301, %v301
    %v304 = vmin.f32 16.0, %v303
    %v305 = vmul.f32 %v304, 2.1237322e-06
    %v306 = vadd.f32 %v305, 0.00028619796
    %v307 = vmul.f32 %v304, %v306
    %v308 = vadd.f32 %v307, 0.0036580483
    %v309 = vmul.f32 %v304, %v308
    %v310 = vadd.f32 %v309, 0.05243302
    %v311 = vmul.f32 %v304, %v310
    %v312 = vadd.f32 %v311, 0.18741608
    %v313 = vmul.f32 %v304, %v312
    %v314 = vadd.f32 %v313, 1.1283791
    %v315 = vmul.f32 %v301, %v314
    %v316 = vmul.f32 %v304, 3.8918573e-05
    %v317 = vadd.f32 %v316, 0.001143296
    %v318 = vmul.f32 %v304, %v317
    %v319 = vadd.f32 %v318, 0.014752088
    %v320 = vmul.f32 %v304, %v319
    %v321 = vadd.f32 %v320, 0.112945676
    %v322 = vmul.f32 %v304, %v321
    %v323 = vadd.f32 %v322, 0.4994258
    %v324 = vmul.f32 %v304, %v323
    %v325 = vadd.f32 %v324, 1.0
    %v326 = vrcp.pop %v325
    %v327 = vmul.f32 %v325, %v326
    %v328 = vsub.f32 1.0, %v327
    %v329 = vmul.f32 %v326, %v328
    %v330 = vadd.f32 %v326, %v329
    %vm331 = vweird.f32 %v325
    %vm332 = vweird.f32 %v326
    %vm333 = vmor %vm331, %vm332
    %v334 = vsel %vm333, %v326, %v330
    %v335 = vand.u32 2147483647, %v325
    %vm336 = vcmp.eq.f32.partialorder %v335, 8.507059e+37
    %v337 = vand.u32 %v325, 2147483648
    %v338 = vor.u32 1.1754944e-38, %v337
    %v339 = vsel %vm336, %v338, %v334
    %v340 = vmul.f32 %v315, %v339
    %v341 = vmin.f32 %v340, 1.0
    %v342 = vmax.f32 %v341, -1.0
    %v343 = vmul.f32 %v302, %v302
    %v344 = vmin.f32 16.0, %v343
    %v345 = vmul.f32 %v344, 2.1237322e-06
    %v346 = vadd.f32 %v345, 0.00028619796
    %v347 = vmul.f32 %v344, %v346
    %v348 = vadd.f32 %v347, 0.0036580483
    %v349 = vmul.f32 %v344, %v348
    %v350 = vadd.f32 %v349, 0.05243302
    %v351 = vmul.f32 %v344, %v350
    %v352 = vadd.f32 %v351, 0.18741608
    %v353 = vmul.f32 %v344, %v352
    %v354 = vadd.f32 %v353, 1.1283791
    %v355 = vmul.f32 %v302, %v354
    %v356 = vmul.f32 %v344, 3.8918573e-05
    %v357 = vadd.f32 %v356, 0.001143296
    %v358 = vmul.f32 %v344, %v357
    %v359 = vadd.f32 %v358, 0.014752088
    %v360 = vmul.f32 %v344, %v359
    %v361 = vadd.f32 %v360, 0.112945676
    %v362 = vmul.f32 %v344, %v361
    %v363 = vadd.f32 %v362, 0.4994258
    %v364 = vmul.f32 %v344, %v363
    %v365 = vadd.f32 %v364, 1.0
    %v366 = vrcp.pop %v365
    %v367 = vmul.f32 %v365, %v366
    %v368 = vsub.f32 1.0, %v367
    %v369 = vmul.f32 %v366, %v368
    %v370 = vadd.f32 %v366, %v369
    %vm371 = vweird.f32 %v365
    %vm372 = vweird.f32 %v366
    %vm373 = vmor %vm371, %vm372
    %v374 = vsel %vm373, %v366, %v370
    %v375 = vand.u32 2147483647, %v365
    %vm376 = vcmp.eq.f32.partialorder %v375, 8.507059e+37
    %v377 = vand.u32 %v365, 2147483648
    %v378 = vor.u32 1.1754944e-38, %v377
    %v379 = vsel %vm376, %v378, %v374
    %v380 = vmul.f32 %v355, %v379
    %v381 = vmin.f32 %v380, 1.0
    %v382 = vmax.f32 %v381, -1.0
    %v383 = vadd.f32 %v342, 1.0
    %v384 = vadd.f32 %v382, 1.0
    %v385 = vmul.f32 %v299, %v383
    %v386 = vmul.f32 %v300, %v384
    %v387 = vld [vmem:[#allocation2] sm:$0xff]
    %v388 = vld [vmem:[#allocation2 + $0x8] sm:$0xff]
    %v389 = vpack.c.bf16 %v386, %v385
    %v390 = vld [vmem:[%s225] sm:$0xf]
    %v391 = vld [vmem:[%s225 + $0x4] sm:$0xf]
    %v392 = vld [vmem:[%s225 + $0x8] sm:$0xf]
    %v393 = vld [vmem:[%s225 + $0xc] sm:$0xf]
    %v394 = vld [vmem:[%s225 + $0x10] sm:$0xf]
    %v395 = vld [vmem:[%s225 + $0x14] sm:$0xf]
    %v396 = vld [vmem:[%s225 + $0x18] sm:$0xf]
    %v397 = vld [vmem:[%s225 + $0x1c] sm:$0xf]
    %v398 = vld [vmem:[%s225 + $0x20] sm:$0xf]
    %v399 = vld [vmem:[%s225 + $0x24] sm:$0xf]
    %v400 = vld [vmem:[%s225 + $0x28] sm:$0xf]
    %v401 = vld [vmem:[%s225 + $0x2c] sm:$0xf]
    %v402 = vld [vmem:[%s225 + $0x30] sm:$0xf]
    %v403 = vld [vmem:[%s225 + $0x34] sm:$0xf]
    %v404 = vld [vmem:[%s225 + $0x38] sm:$0xf]
    %v405 = vld [vmem:[%s225 + $0x3c] sm:$0xf]
    %v422 = vunpack.c.l.b16 %v390
    %v423 = vunpack.c.l.b16 %v391
    %v424 = vunpack.c.l.b16 %v392
    %v425 = vunpack.c.l.b16 %v393
    %v426 = vunpack.c.l.b16 %v394
    %v427 = vunpack.c.l.b16 %v395
    %v428 = vunpack.c.l.b16 %v396
    %v429 = vunpack.c.l.b16 %v397
    %v430 = vunpack.c.l.b16 %v398
    %v431 = vunpack.c.l.b16 %v399
    %v432 = vunpack.c.l.b16 %v400
    %v433 = vunpack.c.l.b16 %v401
    %v434 = vunpack.c.l.b16 %v402
    %v435 = vunpack.c.l.b16 %v403
    %v436 = vunpack.c.l.b16 %v404
    %v437 = vunpack.c.l.b16 %v405
    %v438 = vpack.c.b16 %v423, %v422
    %v439 = vpack.c.b16 %v425, %v424
    %v440 = vpack.c.b16 %v427, %v426
    %v441 = vpack.c.b16 %v429, %v428
    %v442 = vpack.c.b16 %v431, %v430
    %v443 = vpack.c.b16 %v433, %v432
    %v444 = vpack.c.b16 %v435, %v434
    %v445 = vpack.c.b16 %v437, %v436
    %454 = vmatpush.bf16.msra.mxu0 %v445
    %455 = vmatpush.bf16.msra.mxu0 %v444
    %456 = vmatpush.bf16.msra.mxu0 %v443
    %457 = vmatpush.bf16.msra.mxu0 %v442
    %458 = vmatpush.bf16.msra.mxu0 %v441
    %459 = vmatpush.bf16.msra.mxu0 %v440
    %460 = vmatpush.bf16.msra.mxu0 %v439
    %461 = vmatpush.bf16.msra.mxu0 %v438
    %462 = vmatmul.bf16.gmra.mxu0 %v389
    %v463 = vpop.f32.mrf.mxu0
    %v464 = vadd.f32 0.0, %v463
    %v465 = vpop.f32.mrf.mxu0
    %v466 = vadd.f32 0.0, %v465
    %467 = vdwg.mxu0
    %v468 = vadd.f32 %v387, %v464
    %v469 = vadd.f32 %v388, %v466
    %470 = vst.msk [vmem:[#allocation2] sm:$0xff] %vm281, %v468
    %471 = vst.msk [vmem:[#allocation2 + $0x8] sm:$0xff] %vm281, %v469
    // Predicated region
    $region26: #{boom_forward.1} parent=1 // pred_check
      %p472 = pneg %p240
    $region27: #{boom_forward.1} parent=1 // pred_check_branch
      %474 = sbr.rel (%p472) target = $region29
    $region28: #{boom_forward.1} parent=1 // pred_region
      %v475 = vld [vmem:[#allocation2] sm:$0xff]
      %v476 = vld [vmem:[#allocation2 + $0x8] sm:$0xff]
      %v477 = vld [vmem:[%s4] sm:$0x1]
      %v479 = vperm.slane %v477, 0
      %v481 = vadd.f32 %v475, %v479
      %v482 = vadd.f32 %v476, %v479
      %483 = vst.msk [vmem:[#allocation4] sm:$0xff] %vm281, %v481
      %484 = vst.msk [vmem:[#allocation4 + $0x8] sm:$0xff] %vm281, %v482
    $region29: #{boom_forward.1} parent=1 // pred_fallthru
      _
    // Predicated region
    $region30: #{boom_forward.1} parent=1 // pred_check
      _
    $region31: #{boom_forward.1} parent=1 // pred_check_branch
      %486 = sbr.rel (0) target = $region33
    $region32: #{boom_forward.1} parent=1 // pred_region
      %488 = vsyncadd [#allocation5], 0
      %s489 = sshll.u32 [#allocation4], 4
      %s490 = int_to_ptr.vmem [resolvable:$true] %s489
      %s491 = sshll.u32 %s5, 4
      %s492 = int_to_ptr.hbm [resolvable:$true] %s491
      %497 = dma.vmem_to_hbm [thread:$0]  %s490, 256, %s492, [#allocation5], 128, 128, 8
    $region33: #{boom_forward.1} parent=1 // pred_fallthru
      _
    // Predicated region
    $region34: #{boom_forward.1} parent=1 // pred_check
      _
    $region35: #{boom_forward.1} parent=1 // pred_check_branch
      %499 = sbr.rel (0) target = $region37
    $region36: #{boom_forward.1} parent=1 // pred_region
      %501 = dma.done [#allocation5], 256
    $region37: #{boom_forward.1} parent=1 // pred_fallthru
      _
    %502 = vsyncpa [#allocation5], 1

</llo_original>
